<compile_context>
chip_gen: v5e
topology: v5e:2x2
jax: 0.10.0
libtpu: 0.0.40
codegen_flags: <defaults>
</compile_context>

<pallas_src>
import jax
import jax.numpy as jnp
from jax.experimental import pallas as pl
from jax.experimental.pallas import tpu as pltpu


# Column layout of the packed parameter array (16, 39):
#   [0:4)   W1 (16,4)    [4:5)   b1 (16,1)
#   [5:21)  W2 (16,16)   [21:22) b2 (16,1)
#   [22:38) W3 (5,16) zero-padded to 16 rows
#   [38:39) b3 (5,1)  zero-padded to 16 rows
_PACKED_COLS = 39


def _mlp_kernel(x0_ref, x1_ref, x2_ref, x3_ref, p_ref, o_ref):
    f32 = jnp.float32
    # Raw scalar features, each (1, TB), cast in-kernel (inputs may be int).
    x0 = x0_ref[...].astype(f32)
    x1 = x1_ref[...].astype(f32)
    x2 = x2_ref[...].astype(f32)
    x3 = x3_ref[...].astype(f32)

    p = p_ref[...]                 # (16, 39) f32, VMEM-resident across steps
    w1 = p[:, 0:4]                 # (16, 4)
    b1 = p[:, 4:5]                 # (16, 1)
    w2 = p[:, 5:21]                # (16, 16)
    b2 = p[:, 21:22]               # (16, 1)
    w3 = p[0:5, 22:38]             # (5, 16)
    b3 = p[0:5, 38:39]             # (5, 1)

    # Layer 1 (4 -> 16): K=4, done as broadcast multiply-adds on the VPU
    # (avoids forming a (4, TB) stack and a <3%-utilization MXU push).
    h1 = (w1[:, 0:1] * x0 + w1[:, 1:2] * x1 +
          w1[:, 2:3] * x2 + w1[:, 3:4] * x3 + b1)          # (16, TB)
    h1 = jnp.maximum(h1, 0.0)

    # Layer 2 (16 -> 16) and Layer 3 (16 -> 5) on the MXU, f32 accumulation.
    h2 = jnp.maximum(
        jnp.dot(w2, h1, preferred_element_type=f32) + b2, 0.0)   # (16, TB)
    out = jnp.dot(w3, h2, preferred_element_type=f32) + b3       # (5, TB)

    o_ref[...] = out.astype(o_ref.dtype)


def pack_params(params):
    """Pack (w1,b1,w2,b2,w3,b3) -- PyTorch (out,in)/(out,1) layout -- into one
    (16, 39) f32 array (w3/b3 zero-padded from 5 to 16 rows)."""
    w1, b1, w2, b2, w3, b3 = params
    w3p = jnp.zeros((16, 16), jnp.float32).at[:5, :].set(w3.astype(jnp.float32))
    b3p = jnp.zeros((16, 1), jnp.float32).at[:5, :].set(b3.astype(jnp.float32))
    packed = jnp.concatenate(
        [w1.astype(jnp.float32), b1.astype(jnp.float32),
         w2.astype(jnp.float32), b2.astype(jnp.float32), w3p, b3p], axis=1)
    assert packed.shape == (16, _PACKED_COLS)
    return packed


def numerical_part_forward(inputs, params, *, block_b=2048):
    """inputs: dict of 4 arrays (int or float), each shape (B,).
    params: (w1,b1,w2,b2,w3,b3) with weights (out,in) and biases (out,1).
    Returns (B, 5) float32, matching the PyTorch module."""
    x0 = inputs["unrecognized_tags_count"]
    x1 = inputs["reputation"]
    x2 = inputs["undeleted_answers"]
    x3 = inputs["user_life_days"]
    B = x0.shape[0]
    # Free view: put B on the lane axis.
    x0, x1, x2, x3 = (v.reshape(1, B) for v in (x0, x1, x2, x3))

    p = pack_params(params)  # (16, 39) f32

    # Batch tile on the 128-lane axis. block == full B for tiny batches,
    # otherwise a multiple of 128 (ragged tail handled by Pallas padding).
    if B <= 128:
        tb = B
    else:
        tb = max(128, (min(block_b, B) // 128) * 128)
    grid = (pl.cdiv(B, tb),)

    feat_spec = pl.BlockSpec((1, tb), lambda i: (0, i))
    param_spec = pl.BlockSpec(p.shape, lambda i: (0, 0))   # resident, 1 DMA
    out_spec = pl.BlockSpec((5, tb), lambda i: (0, i))

    out_t = pl.pallas_call(
        _mlp_kernel,
        out_shape=jax.ShapeDtypeStruct((5, B), jnp.float32),
        grid=grid,
        in_specs=[feat_spec, feat_spec, feat_spec, feat_spec, param_spec],
        out_specs=out_spec,
        compiler_params=pltpu.CompilerParams(
            dimension_semantics=("parallel",),
            vmem_limit_bytes=32 * 1024 * 1024,
        ),
    )(x0, x1, x2, x3, p)

    return out_t.T  # (B, 5)


def init_params(key):
    """nn.Linear-style init; weights stored (out, in), biases (out, 1)."""
    ks = jax.random.split(key, 6)

    def lin(kw, kb, fan_in, fan_out):
        bound = 1.0 / jnp.sqrt(jnp.float32(fan_in))
        w = jax.random.uniform(kw, (fan_out, fan_in), jnp.float32, -bound, bound)
        b = jax.random.uniform(kb, (fan_out, 1), jnp.float32, -bound, bound)
        return w, b

    w1, b1 = lin(ks[0], ks[1], 4, 16)
    w2, b2 = lin(ks[2], ks[3], 16, 16)
    w3, b3 = lin(ks[4], ks[5], 16, 5)
    return (w1, b1, w2, b2, w3, b3)


def _reference(inputs, params):
    """Pure-JAX reference of the same forward pass (PyTorch semantics)."""
    x = jnp.stack(
        (
            inputs["unrecognized_tags_count"].astype(jnp.float32),
            inputs["reputation"].astype(jnp.float32),
            inputs["undeleted_answers"].astype(jnp.float32),
            inputs["user_life_days"].astype(jnp.float32),
        ),
        axis=1,
    )  # (B, 4)
    w1, b1, w2, b2, w3, b3 = params
    h = jnp.maximum(x @ w1.T + b1.T, 0.0)
    h = jnp.maximum(h @ w2.T + b2.T, 0.0)
    return h @ w3.T + b3.T


def _make_inputs(key, B):
    k1, k2, k3, k4 = jax.random.split(key, 4)
    return {
        "unrecognized_tags_count": jax.random.randint(k1, (B,), 0, 10).astype(jnp.int32),
        "reputation": jax.random.uniform(k2, (B,), jnp.float32, 0.0, 1000.0),
        "undeleted_answers": jax.random.randint(k3, (B,), 0, 50).astype(jnp.int32),
        "user_life_days": jax.random.uniform(k4, (B,), jnp.float32, 0.0, 3650.0),
    }


if __name__ == "__main__":
    key = jax.random.PRNGKey(0)
    kp, ki = jax.random.split(key)
    params = init_params(kp)
    k_small, k_big = jax.random.split(ki)

    # Small batch (module-scale demo): single grid step, block == B.
    B = 8
    inp = _make_inputs(k_small, B)
    out = numerical_part_forward(inp, params)
    jax.block_until_ready(out)
    assert out.shape == (B, 5)
    assert jnp.allclose(out, _reference(inp, params), atol=1e-4, rtol=1e-4)

    # Larger batch exercising the multi-step, ragged (non-multiple-of-128) grid.
    B2 = 300
    inp2 = _make_inputs(k_big, B2)
    out2 = numerical_part_forward(inp2, params, block_b=128)
    jax.block_until_ready(out2)
    assert out2.shape == (B2, 5)
    assert jnp.allclose(out2, _reference(inp2, params), atol=1e-4, rtol=1e-4)

    print("KERNEL_OK")
</pallas_src>

<mosaic_0001>
module attributes {stable_mosaic.version = 11 : i64} {
  func.func @_mlp_kernel(%arg0: i32, %arg1: memref<1x8xi32, #tpu.memory_space<vmem>>, %arg2: memref<1x8xf32, #tpu.memory_space<vmem>>, %arg3: memref<1x8xi32, #tpu.memory_space<vmem>>, %arg4: memref<1x8xf32, #tpu.memory_space<vmem>>, %arg5: memref<16x39xf32, #tpu.memory_space<vmem>>, %arg6: memref<5x8xf32, #tpu.memory_space<vmem>>) attributes {dimension_semantics = [#tpu.dimension_semantics<parallel>], iteration_bounds = array<i64: 1>, scalar_prefetch = 0 : i64, scratch_operands = 0 : i64, tpu.core_type = #tpu.core_type<tc>, window_params = [{transform_indices = @transform_0, window_bounds = array<i64: 1, 8>}, {transform_indices = @transform_1, window_bounds = array<i64: 1, 8>}, {transform_indices = @transform_2, window_bounds = array<i64: 1, 8>}, {transform_indices = @transform_3, window_bounds = array<i64: 1, 8>}, {pipeline_mode = #tpu.pipeline_mode<synchronous>, transform_indices = @transform_4, window_bounds = array<i64: 16, 39>}, {transform_indices = @transform_5, window_bounds = array<i64: 5, 8>}]} {
    %c0 = arith.constant 0 : index
    %c0_0 = arith.constant 0 : index
    %0 = vector.load %arg1[%c0, %c0_0] : memref<1x8xi32, #tpu.memory_space<vmem>>, vector<1x8xi32>
    %1 = arith.sitofp %0 : vector<1x8xi32> to vector<1x8xf32>
    %c0_1 = arith.constant 0 : index
    %c0_2 = arith.constant 0 : index
    %2 = vector.load %arg2[%c0_1, %c0_2] : memref<1x8xf32, #tpu.memory_space<vmem>>, vector<1x8xf32>
    %c0_3 = arith.constant 0 : index
    %c0_4 = arith.constant 0 : index
    %3 = vector.load %arg3[%c0_3, %c0_4] : memref<1x8xi32, #tpu.memory_space<vmem>>, vector<1x8xi32>
    %4 = arith.sitofp %3 : vector<1x8xi32> to vector<1x8xf32>
    %c0_5 = arith.constant 0 : index
    %c0_6 = arith.constant 0 : index
    %5 = vector.load %arg4[%c0_5, %c0_6] : memref<1x8xf32, #tpu.memory_space<vmem>>, vector<1x8xf32>
    %c0_7 = arith.constant 0 : index
    %c0_8 = arith.constant 0 : index
    %6 = vector.load %arg5[%c0_7, %c0_8] : memref<16x39xf32, #tpu.memory_space<vmem>>, vector<16x39xf32>
    %7 = vector.extract_strided_slice %6 {offsets = [0, 0], sizes = [16, 4], strides = [1, 1]} : vector<16x39xf32> to vector<16x4xf32>
    %8 = vector.extract_strided_slice %6 {offsets = [0, 4], sizes = [16, 1], strides = [1, 1]} : vector<16x39xf32> to vector<16x1xf32>
    %9 = vector.extract_strided_slice %6 {offsets = [0, 5], sizes = [16, 16], strides = [1, 1]} : vector<16x39xf32> to vector<16x16xf32>
    %10 = vector.extract_strided_slice %6 {offsets = [0, 21], sizes = [16, 1], strides = [1, 1]} : vector<16x39xf32> to vector<16x1xf32>
    %11 = vector.extract_strided_slice %6 {offsets = [0, 22], sizes = [5, 16], strides = [1, 1]} : vector<16x39xf32> to vector<5x16xf32>
    %12 = vector.extract_strided_slice %6 {offsets = [0, 38], sizes = [5, 1], strides = [1, 1]} : vector<16x39xf32> to vector<5x1xf32>
    %13 = vector.extract_strided_slice %7 {offsets = [0, 0], sizes = [16, 1], strides = [1, 1]} : vector<16x4xf32> to vector<16x1xf32>
    %14 = vector.broadcast %13 : vector<16x1xf32> to vector<16x8xf32>
    %15 = vector.broadcast %1 : vector<1x8xf32> to vector<16x8xf32>
    %16 = arith.mulf %14, %15 : vector<16x8xf32>
    %17 = vector.extract_strided_slice %7 {offsets = [0, 1], sizes = [16, 1], strides = [1, 1]} : vector<16x4xf32> to vector<16x1xf32>
    %18 = vector.broadcast %17 : vector<16x1xf32> to vector<16x8xf32>
    %19 = vector.broadcast %2 : vector<1x8xf32> to vector<16x8xf32>
    %20 = arith.mulf %18, %19 : vector<16x8xf32>
    %21 = arith.addf %16, %20 : vector<16x8xf32>
    %22 = vector.extract_strided_slice %7 {offsets = [0, 2], sizes = [16, 1], strides = [1, 1]} : vector<16x4xf32> to vector<16x1xf32>
    %23 = vector.broadcast %22 : vector<16x1xf32> to vector<16x8xf32>
    %24 = vector.broadcast %4 : vector<1x8xf32> to vector<16x8xf32>
    %25 = arith.mulf %23, %24 : vector<16x8xf32>
    %26 = arith.addf %21, %25 : vector<16x8xf32>
    %27 = vector.extract_strided_slice %7 {offsets = [0, 3], sizes = [16, 1], strides = [1, 1]} : vector<16x4xf32> to vector<16x1xf32>
    %28 = vector.broadcast %27 : vector<16x1xf32> to vector<16x8xf32>
    %29 = vector.broadcast %5 : vector<1x8xf32> to vector<16x8xf32>
    %30 = arith.mulf %28, %29 : vector<16x8xf32>
    %31 = arith.addf %26, %30 : vector<16x8xf32>
    %32 = vector.broadcast %8 : vector<16x1xf32> to vector<16x8xf32>
    %33 = arith.addf %31, %32 : vector<16x8xf32>
    %cst = arith.constant 0.000000e+00 : f32
    %34 = vector.broadcast %cst : f32 to vector<16x8xf32>
    %35 = arith.maximumf %33, %34 : vector<16x8xf32>
    %cst_9 = arith.constant dense<0.000000e+00> : vector<16x8xf32>
    %36 = tpu.matmul %9, %35, %cst_9 {dimension_numbers = #tpu.dot_dimension_numbers<[1], [0], [0], [1], [0, 0, 1, 1], [], []>} : vector<16x16xf32>, vector<16x8xf32>, vector<16x8xf32> -> vector<16x8xf32>
    %37 = vector.broadcast %10 : vector<16x1xf32> to vector<16x8xf32>
    %38 = arith.addf %36, %37 : vector<16x8xf32>
    %cst_10 = arith.constant 0.000000e+00 : f32
    %39 = vector.broadcast %cst_10 : f32 to vector<16x8xf32>
    %40 = arith.maximumf %38, %39 : vector<16x8xf32>
    %cst_11 = arith.constant dense<0.000000e+00> : vector<5x8xf32>
    %41 = tpu.matmul %11, %40, %cst_11 {dimension_numbers = #tpu.dot_dimension_numbers<[1], [0], [0], [1], [0, 0, 1, 1], [], []>} : vector<5x16xf32>, vector<16x8xf32>, vector<5x8xf32> -> vector<5x8xf32>
    %42 = vector.broadcast %12 : vector<5x1xf32> to vector<5x8xf32>
    %43 = arith.addf %41, %42 : vector<5x8xf32>
    %c0_12 = arith.constant 0 : index
    %c0_13 = arith.constant 0 : index
    %44 = vector.load %arg6[%c0_12, %c0_13] : memref<5x8xf32, #tpu.memory_space<vmem>>, vector<5x8xf32>
    tpu.vector_store %arg6[%c0_12, %c0_13], %43 {strides = array<i32>} : memref<5x8xf32, #tpu.memory_space<vmem>>, vector<5x8xf32>,
    return
  }
  func.func @transform_0(%arg0: i32) -> (i32, i32) {
    %c0_i32 = arith.constant 0 : i32
    %c0_i32_0 = arith.constant 0 : i32
    return %c0_i32, %arg0 : i32, i32
  }
  func.func @transform_1(%arg0: i32) -> (i32, i32) {
    %c0_i32 = arith.constant 0 : i32
    %c0_i32_0 = arith.constant 0 : i32
    return %c0_i32, %arg0 : i32, i32
  }
  func.func @transform_2(%arg0: i32) -> (i32, i32) {
    %c0_i32 = arith.constant 0 : i32
    %c0_i32_0 = arith.constant 0 : i32
    return %c0_i32, %arg0 : i32, i32
  }
  func.func @transform_3(%arg0: i32) -> (i32, i32) {
    %c0_i32 = arith.constant 0 : i32
    %c0_i32_0 = arith.constant 0 : i32
    return %c0_i32, %arg0 : i32, i32
  }
  func.func @transform_4(%arg0: i32) -> (i32, i32) {
    %c0_i32 = arith.constant 0 : i32
    %c0_i32_0 = arith.constant 0 : i32
    %c0_i32_1 = arith.constant 0 : i32
    return %c0_i32, %c0_i32_0 : i32, i32
  }
  func.func @transform_5(%arg0: i32) -> (i32, i32) {
    %c0_i32 = arith.constant 0 : i32
    %c0_i32_0 = arith.constant 0 : i32
    return %c0_i32, %arg0 : i32, i32
  }
}

</mosaic_0001>

<llo_original>
// kernel: tpu_custom_call.1
$region0: #{tpu_custom_call.1}
  #allocation0 [shape = 'u32[]', space=smem, size = 0x4, offset = 0x4, fixed_abs, tag = 'smem constant byte address 0x4 - core index']
  #allocation1 [shape = 'u32[72,128]{1,0:T(1,128)}', space=vmem, size = 0x9000, scoped, tag = 'internal scratch']
  %s0 = inlined_call_operand.hbm [shape: s32[1,8], index: 0, kind: input, shape index: {}]
  %s1 = inlined_call_operand.hbm [shape: f32[1,8], index: 1, kind: input, shape index: {}]
  %s2 = inlined_call_operand.vmem [shape: s32[1,8], index: 2, kind: input, shape index: {}]
  %s3 = inlined_call_operand.vmem [shape: f32[1,8], index: 3, kind: input, shape index: {}]
  %s4 = inlined_call_operand.hbm [shape: f32[16,39], index: 4, kind: input, shape index: {}]
  %s5 = inlined_call_operand.hbm [shape: f32[5,8], index: 5, kind: output, shape index: {}]
  %s6 = sld [smem:[#allocation0]]
  $region42: #{tpu_custom_call.1} parent=0
    _
  %s8 = ssub.s32 1, %s6
  %s9 = scalar_select 0, %s8, %s6
  $region1: #{tpu_custom_call.1} parent=0
    #allocation2 [shape = 'u8[512]{0}', space=vmem, size = 0x400, scoped, tag = 'input window, operand 0, single buffered']
    #allocation3 [shape = 's32[1]{0}', space=sflag, size = 0x4, scoped, tag = 'scoped memory for tpu_custom_call.1']
    #allocation4 [shape = 's32[1]{0}', space=sflag, size = 0x4, scoped, tag = 'scoped memory for tpu_custom_call.1']
    #allocation5 [shape = 'u8[512]{0}', space=vmem, size = 0x400, scoped, tag = 'input window, operand 1, single buffered']
    #allocation6 [shape = 's32[1]{0}', space=sflag, size = 0x4, scoped, tag = 'scoped memory for tpu_custom_call.1']
    #allocation7 [shape = 'u8[8192]{0}', space=vmem, size = 0x2000, scoped, tag = 'input window, operand 4, single buffered']
    #allocation8 [shape = 'u8[4096]{0}', space=vmem, size = 0x1000, scoped, tag = 'output window, operand 0, single buffered']
    %10 = vsyncpa [#allocation3], 0
    %11 = vsyncpa [#allocation6], 0
    %12 = vsyncpa [#allocation4], 0
    // Predicated region
    $region2: #{tpu_custom_call.1} parent=1 // pred_check
      _
    $region3: #{tpu_custom_call.1} parent=1 // pred_check_branch
      %14 = sbr.rel (0) target = $region5
    $region4: #{tpu_custom_call.1} parent=1 // pred_region
      %16 = vsyncadd [#allocation3], 0
      %s18 = sshll.u32 %s0, 4
      %s19 = int_to_ptr.hbm [resolvable:$true] %s18
      %s20 = sshll.u32 [#allocation2], 4
      %s21 = int_to_ptr.vmem [resolvable:$true] %s20
      %23 = dma.hbm_to_vmem [thread:$0]  %s19, 16, %s21, [#allocation3]
    $region5: #{tpu_custom_call.1} parent=1 // pred_fallthru
      _
    // Predicated region
    $region6: #{tpu_custom_call.1} parent=1 // pred_check
      _
    $region7: #{tpu_custom_call.1} parent=1 // pred_check_branch
      %25 = sbr.rel (0) target = $region9
    $region8: #{tpu_custom_call.1} parent=1 // pred_region
      %27 = vsyncadd [#allocation6], 0
      %s29 = sshll.u32 %s1, 4
      %s30 = int_to_ptr.hbm [resolvable:$true] %s29
      %s31 = sshll.u32 [#allocation5], 4
      %s32 = int_to_ptr.vmem [resolvable:$true] %s31
      %34 = dma.hbm_to_vmem [thread:$0]  %s30, 16, %s32, [#allocation6]
    $region9: #{tpu_custom_call.1} parent=1 // pred_fallthru
      _
    // Predicated region
    $region10: #{tpu_custom_call.1} parent=1 // pred_check
      _
    $region11: #{tpu_custom_call.1} parent=1 // pred_check_branch
      %36 = sbr.rel (0) target = $region13
    $region12: #{tpu_custom_call.1} parent=1 // pred_region
      _
    $region13: #{tpu_custom_call.1} parent=1 // pred_fallthru
      _
    // Predicated region
    $region14: #{tpu_custom_call.1} parent=1 // pred_check
      _
    $region15: #{tpu_custom_call.1} parent=1 // pred_check_branch
      %38 = sbr.rel (0) target = $region17
    $region16: #{tpu_custom_call.1} parent=1 // pred_region
      _
    $region17: #{tpu_custom_call.1} parent=1 // pred_fallthru
      _
    // Predicated region
    $region18: #{tpu_custom_call.1} parent=1 // pred_check
      _
    $region19: #{tpu_custom_call.1} parent=1 // pred_check_branch
      %40 = sbr.rel (0) target = $region21
    $region20: #{tpu_custom_call.1} parent=1 // pred_region
      %42 = vsyncadd [#allocation6], 0
      %s43 = sshll.u32 %s4, 4
      %s44 = int_to_ptr.hbm [resolvable:$true] %s43
      %s45 = sshll.u32 [#allocation7], 4
      %s46 = int_to_ptr.vmem [resolvable:$true] %s45
      %51 = dma.hbm_to_vmem [thread:$0]  %s44, 256, %s46, [#allocation6], 128, 128, 8
    $region21: #{tpu_custom_call.1} parent=1 // pred_fallthru
      _
    // Predicated region
    $region22: #{tpu_custom_call.1} parent=1 // pred_check
      _
    $region23: #{tpu_custom_call.1} parent=1 // pred_check_branch
      %53 = sbr.rel (0) target = $region25
    $region24: #{tpu_custom_call.1} parent=1 // pred_region
      %55 = dma.done [#allocation3], 16
    $region25: #{tpu_custom_call.1} parent=1 // pred_fallthru
      _
    // Predicated region
    $region26: #{tpu_custom_call.1} parent=1 // pred_check
      _
    $region27: #{tpu_custom_call.1} parent=1 // pred_check_branch
      %57 = sbr.rel (0) target = $region29
    $region28: #{tpu_custom_call.1} parent=1 // pred_region
      %59 = dma.done [#allocation6], 16
    $region29: #{tpu_custom_call.1} parent=1 // pred_fallthru
      _
    // Predicated region
    $region30: #{tpu_custom_call.1} parent=1 // pred_check
      _
    $region31: #{tpu_custom_call.1} parent=1 // pred_check_branch
      %61 = sbr.rel (0) target = $region33
    $region32: #{tpu_custom_call.1} parent=1 // pred_region
      %63 = dma.done [#allocation6], 256
    $region33: #{tpu_custom_call.1} parent=1 // pred_fallthru
      _
    %v64 = vld [vmem:[#allocation2] sm:$0x1]
    %v65 = vcvt.s32.f32 %v64
    %v66 = vld [vmem:[#allocation5] sm:$0x1]
    %v67 = vld [vmem:[%s2] sm:$0x1]
    %v68 = vcvt.s32.f32 %v67
    %v69 = vld [vmem:[%s3] sm:$0x1]
    %v70 = vld [vmem:[#allocation7] sm:$0xff]
    %v71 = vld [vmem:[#allocation7 + $0x8] sm:$0xff]
    %73 = vset.pattern.permute.xlu0 0
    %74 = vperm.xlu0 %73, %v70
    %v75 = vpop.permute.xlu0 %74
    %78 = vset.pattern.permute.xlu0 0
    %79 = vperm.xlu0 %78, %v71
    %v80 = vpop.permute.xlu0 %79
    %v83 = vperm.slane %v65, 0
    %v85 = vmul.f32 %v75, %v83
    %v86 = vmul.f32 %v80, %v83
    %87 = vset.pattern.permute.xlu0 1
    %88 = vperm.xlu0 %87, %v70
    %v89 = vpop.permute.xlu0 %88
    %91 = vset.pattern.permute.xlu0 1
    %92 = vperm.xlu0 %91, %v71
    %v93 = vpop.permute.xlu0 %92
    %v96 = vperm.slane %v66, 0
    %v98 = vmul.f32 %v89, %v96
    %v99 = vmul.f32 %v93, %v96
    %v100 = vadd.f32 %v85, %v98
    %v101 = vadd.f32 %v86, %v99
    %102 = vset.pattern.permute.xlu0 2
    %103 = vperm.xlu0 %102, %v70
    %v104 = vpop.permute.xlu0 %103
    %106 = vset.pattern.permute.xlu0 2
    %107 = vperm.xlu0 %106, %v71
    %v108 = vpop.permute.xlu0 %107
    %v111 = vperm.slane %v68, 0
    %v113 = vmul.f32 %v104, %v111
    %v114 = vmul.f32 %v108, %v111
    %v115 = vadd.f32 %v100, %v113
    %v116 = vadd.f32 %v101, %v114
    %117 = vset.pattern.permute.xlu0 3
    %118 = vperm.xlu0 %117, %v70
    %v119 = vpop.permute.xlu0 %118
    %121 = vset.pattern.permute.xlu0 3
    %122 = vperm.xlu0 %121, %v71
    %v123 = vpop.permute.xlu0 %122
    %v126 = vperm.slane %v69, 0
    %v128 = vmul.f32 %v119, %v126
    %v129 = vmul.f32 %v123, %v126
    %v130 = vadd.f32 %v115, %v128
    %v131 = vadd.f32 %v116, %v129
    %132 = vset.pattern.permute.xlu0 4
    %133 = vperm.xlu0 %132, %v70
    %v134 = vpop.permute.xlu0 %133
    %136 = vset.pattern.permute.xlu0 4
    %137 = vperm.xlu0 %136, %v71
    %v138 = vpop.permute.xlu0 %137
    %v140 = vadd.f32 %v130, %v134
    %v141 = vadd.f32 %v131, %v138
    %v142 = vmax.f32 %v140, 0.0
    %v143 = vmax.f32 %v141, 0.0
    %144 = vset.pattern.permute.xlu0 21
    %145 = vperm.xlu0 %144, %v70
    %v146 = vpop.permute.xlu0 %145
    %148 = vset.pattern.permute.xlu0 21
    %149 = vperm.xlu0 %148, %v71
    %v150 = vpop.permute.xlu0 %149
    %152 = vrot.lane.b32.xlu0 %v70, 123
    %v153 = vpop.permute.xlu0 %152
    %154 = vrot.lane.b32.xlu0 %v71, 123
    %v155 = vpop.permute.xlu0 %154
    %vm156 = vcmask 130048
    %v157 = vsel %vm156, %v153, 0
    %v159 = vsel %vm156, %v155, 0
    %161 = vmatpush.msra.mxu0 0.0
    %162 = vmatpush.msra.mxu0 0.0
    %163 = vmatpush.msra.mxu0 0.0
    %164 = vmatpush.msra.mxu0 0.0
    %165 = vmatpush.msra.mxu0 0.0
    %166 = vmatpush.msra.mxu0 0.0
    %167 = vmatpush.msra.mxu0 0.0
    %168 = vmatpush.msra.mxu0 0.0
    %169 = vmatpush.msra.mxu0 0.0
    %170 = vmatpush.msra.mxu0 0.0
    %171 = vmatpush.msra.mxu0 0.0
    %172 = vmatpush.msra.mxu0 0.0
    %173 = vmatpush.msra.mxu0 0.0
    %174 = vmatpush.msra.mxu0 0.0
    %175 = vmatpush.msra.mxu0 %v143
    %176 = vmatpush.msra.mxu0 %v142
    %177 = vmatmul.f32.gmra.mxu0 %v157
    %v178 = vpop.f32.mrf.mxu0
    %v179 = vadd.f32 %v146, %v178
    %180 = vmatmul.f32.gmra.mxu0 %v159
    %v181 = vpop.f32.mrf.mxu0
    %v182 = vadd.f32 %v150, %v181
    %183 = vdwg.mxu0
    %v184 = vmax.f32 %v179, 0.0
    %v185 = vmax.f32 %v182, 0.0
    %186 = vset.pattern.permute.xlu0 38
    %187 = vperm.xlu0 %186, %v70
    %v188 = vpop.permute.xlu0 %187
    %190 = vrot.lane.b32.xlu0 %v70, 106
    %v191 = vpop.permute.xlu0 %190
    %v192 = vsel %vm156, %v191, 0
    %194 = vmatpush.msra.mxu0 0.0
    %195 = vmatpush.msra.mxu0 0.0
    %196 = vmatpush.msra.mxu0 0.0
    %197 = vmatpush.msra.mxu0 0.0
    %198 = vmatpush.msra.mxu0 0.0
    %199 = vmatpush.msra.mxu0 0.0
    %200 = vmatpush.msra.mxu0 0.0
    %201 = vmatpush.msra.mxu0 0.0
    %202 = vmatpush.msra.mxu0 0.0
    %203 = vmatpush.msra.mxu0 0.0
    %204 = vmatpush.msra.mxu0 0.0
    %205 = vmatpush.msra.mxu0 0.0
    %206 = vmatpush.msra.mxu0 0.0
    %207 = vmatpush.msra.mxu0 0.0
    %208 = vmatpush.msra.mxu0 %v185
    %209 = vmatpush.msra.mxu0 %v184
    %210 = vmatmul.f32.gmra.mxu0 %v192
    %v211 = vpop.f32.mrf.mxu0
    %v212 = vadd.f32 %v188, %v211
    %213 = vdwg.mxu0
    %vm214 = vcmask 61440
    %215 = vst.msk [vmem:[#allocation8] sm:$0x1f] %vm214, %v212
    // Predicated region
    $region34: #{tpu_custom_call.1} parent=1 // pred_check
      _
    $region35: #{tpu_custom_call.1} parent=1 // pred_check_branch
      %217 = sbr.rel (0) target = $region37
    $region36: #{tpu_custom_call.1} parent=1 // pred_region
      %219 = vsyncadd [#allocation4], 0
      %s221 = sshll.u32 [#allocation8], 4
      %s222 = int_to_ptr.vmem [resolvable:$true] %s221
      %s223 = sshll.u32 %s5, 4
      %s224 = int_to_ptr.hbm [resolvable:$true] %s223
      %226 = dma.vmem_to_hbm [thread:$0]  %s222, 128, %s224, [#allocation4]
    $region37: #{tpu_custom_call.1} parent=1 // pred_fallthru
      _
    // Predicated region
    $region38: #{tpu_custom_call.1} parent=1 // pred_check
      _
    $region39: #{tpu_custom_call.1} parent=1 // pred_check_branch
      %228 = sbr.rel (0) target = $region41
    $region40: #{tpu_custom_call.1} parent=1 // pred_region
      %230 = dma.done [#allocation4], 128
    $region41: #{tpu_custom_call.1} parent=1 // pred_fallthru
      _
    %231 = vsyncpa [#allocation3], 1
    %232 = vsyncpa [#allocation6], 1
    %233 = vsyncpa [#allocation4], 1

</llo_original>
